<compile_context>
chip_gen: v7x
topology: tpu7x:2x2x1
jax: 0.10.0
libtpu: 0.0.40
codegen_flags: <defaults>
</compile_context>

<pallas_src>
import jax
import jax.numpy as jnp
from jax.experimental import pallas as pl
from jax.experimental.pallas import tpu as pltpu


def lr_kernel(xt_ref, w_ref, bias_ref, out_ref):
    # xt_ref:  (F, TB) int32   VMEM — feature indices (fields x batch lanes)
    # w_ref:   (1, V)  float32 VMEM — LR weight row, resident across the grid
    # bias_ref:(1,)    float32 SMEM — scalar bias
    # out_ref: (1, TB) float32 VMEM — lane-dense logits for this batch tile
    F, TB = xt_ref.shape
    V = w_ref.shape[1]

    x = xt_ref[...]                                            # (F, TB)
    iota_v = jax.lax.broadcasted_iota(jnp.int32, (V, TB), 0)   # hoisted once

    # Multi-hot counts over the vocab with the field sum folded in:
    #   counts[v, b] = #{ f : x[b, f] == v }
    counts = jnp.zeros((V, TB), jnp.float32)
    for f in range(F):                        # F is small & static -> unrolled
        counts = counts + (x[f, :][None, :] == iota_v).astype(jnp.float32)

    # logits[b] = sum_v w[v] * counts[v, b]  — single MXU matmul, (1, TB).
    logits = jnp.dot(w_ref[...], counts,
                     preferred_element_type=jnp.float32,
                     precision=jax.lax.Precision.HIGHEST)
    out_ref[...] = logits + bias_ref[0]
    # TODO(synk): output_activation is None in this config; apply an
    # elementwise activation here if one is ever configured.


def lr_layer(x, weight, bias, *, max_batch_tile=512):
    """x: (B, F) int feature ids; weight: (V, 1) f32; bias: (1,) f32 -> (B, 1) f32."""
    B, F = x.shape
    V = weight.shape[0]

    # Batch tile: multiple of 128 lanes, as large as reasonable.
    if B <= max_batch_tile:
        TB = max(128, ((B + 127) // 128) * 128)
    else:
        TB = max_batch_tile
    Bp = ((B + TB - 1) // TB) * TB            # pad batch to a whole number of tiles

    xt = jnp.transpose(x.astype(jnp.int32))   # (F, B): field rows are lane-major
    if Bp != B:
        xt = jnp.pad(xt, ((0, 0), (0, Bp - B)))   # pad lanes with index 0 (sliced off)

    w_row = weight.reshape(1, V).astype(jnp.float32)   # (1, V) lane-dense weight row
    bias1 = bias.reshape(1).astype(jnp.float32)

    out_row = pl.pallas_call(
        lr_kernel,
        out_shape=jax.ShapeDtypeStruct((1, Bp), jnp.float32),
        grid=(Bp // TB,),
        in_specs=[
            pl.BlockSpec((F, TB), lambda i: (0, i)),            # X tile, streamed
            pl.BlockSpec((1, V), lambda i: (0, 0)),             # weights, resident
            pl.BlockSpec(memory_space=pltpu.MemorySpace.SMEM),  # bias scalar
        ],
        out_specs=pl.BlockSpec((1, TB), lambda i: (0, i)),      # lane-dense output
        compiler_params=pltpu.CompilerParams(
            dimension_semantics=("parallel",),                  # megacore on v7x
        ),
    )(xt, w_row, bias1)

    # TODO(synk): for very large vocabularies (weight row exceeding VMEM, esp.
    # v7x's 64 MiB) keep the table in HBM (memory_space=pl.ANY) and DMA-gather
    # only the needed rows, or tile the vocab axis.

    return out_row[0, :B].reshape(B, 1)


if __name__ == "__main__":
    key = jax.random.PRNGKey(0)
    B, F, V = 8, 8, 64                      # batch, num feature fields, total vocab
    kx, kw = jax.random.split(key)

    # Inputs: categorical feature indices per field (already globally offset).
    x = jax.random.randint(kx, (B, F), 0, V, dtype=jnp.int32)

    # Parameters (deterministic in-script init, matching __init__ shapes):
    #   embedding table: (V, 1)  -- EmbeddingLayer(feature_map, 1)
    #   bias: zeros(1)           -- nn.Parameter(torch.zeros(1))
    weight = jax.random.normal(kw, (V, 1), dtype=jnp.float32) * 0.01
    bias = jnp.zeros((1,), dtype=jnp.float32)

    out = jax.block_until_ready(lr_layer(x, weight, bias))

    # Pure-JAX reference for correctness.
    ref = jnp.take(weight[:, 0], x, axis=0).sum(axis=1, keepdims=True) + bias
    assert out.shape == (B, 1), out.shape
    assert out.dtype == jnp.float32
    assert jnp.allclose(out, ref, atol=1e-5, rtol=1e-4), (out, ref)
    print("KERNEL_OK")
</pallas_src>

<mosaic_0001>
module attributes {stable_mosaic.version = 11 : i64} {
  func.func @lr_kernel(%arg0: i32, %arg1: memref<8x128xi32, #tpu.memory_space<vmem>>, %arg2: memref<1x64xf32, #tpu.memory_space<vmem>>, %arg3: memref<1xf32, #tpu.memory_space<smem>>, %arg4: memref<1x128xf32, #tpu.memory_space<vmem>>) attributes {dimension_semantics = [#tpu.dimension_semantics<parallel>], iteration_bounds = array<i64: 1>, scalar_prefetch = 0 : i64, scratch_operands = 0 : i64, tpu.core_type = #tpu.core_type<tc>, window_params = [{transform_indices = @transform_0, window_bounds = array<i64: 8, 128>}, {pipeline_mode = #tpu.pipeline_mode<synchronous>, transform_indices = @transform_1, window_bounds = array<i64: 1, 64>}, {transform_indices = @transform_2, window_bounds = array<i64: 1>}, {transform_indices = @transform_3, window_bounds = array<i64: 1, 128>}]} {
    %c0 = arith.constant 0 : index
    %c0_0 = arith.constant 0 : index
    %0 = vector.load %arg1[%c0, %c0_0] : memref<8x128xi32, #tpu.memory_space<vmem>>, vector<8x128xi32>
    %1 = tpu.iota {dimensions = array<i32: 0>} : vector<64x128xi32>
    %cst = arith.constant 0.000000e+00 : f32
    %2 = vector.broadcast %cst : f32 to vector<64x128xf32>
    %3 = vector.extract_strided_slice %0 {offsets = [0, 0], sizes = [1, 128], strides = [1, 1]} : vector<8x128xi32> to vector<1x128xi32>
    %4 = vector.shape_cast %3 : vector<1x128xi32> to vector<128xi32>
    %5 = vector.shape_cast %4 : vector<128xi32> to vector<1x128xi32>
    %6 = vector.broadcast %5 : vector<1x128xi32> to vector<64x128xi32>
    %7 = arith.cmpi eq, %6, %1 : vector<64x128xi32>
    %8 = arith.extui %7 : vector<64x128xi1> to vector<64x128xi32>
    %9 = arith.sitofp %8 : vector<64x128xi32> to vector<64x128xf32>
    %10 = arith.addf %2, %9 : vector<64x128xf32>
    %11 = vector.extract_strided_slice %0 {offsets = [1, 0], sizes = [1, 128], strides = [1, 1]} : vector<8x128xi32> to vector<1x128xi32>
    %12 = vector.shape_cast %11 : vector<1x128xi32> to vector<128xi32>
    %13 = vector.shape_cast %12 : vector<128xi32> to vector<1x128xi32>
    %14 = vector.broadcast %13 : vector<1x128xi32> to vector<64x128xi32>
    %15 = arith.cmpi eq, %14, %1 : vector<64x128xi32>
    %16 = arith.extui %15 : vector<64x128xi1> to vector<64x128xi32>
    %17 = arith.sitofp %16 : vector<64x128xi32> to vector<64x128xf32>
    %18 = arith.addf %10, %17 : vector<64x128xf32>
    %19 = vector.extract_strided_slice %0 {offsets = [2, 0], sizes = [1, 128], strides = [1, 1]} : vector<8x128xi32> to vector<1x128xi32>
    %20 = vector.shape_cast %19 : vector<1x128xi32> to vector<128xi32>
    %21 = vector.shape_cast %20 : vector<128xi32> to vector<1x128xi32>
    %22 = vector.broadcast %21 : vector<1x128xi32> to vector<64x128xi32>
    %23 = arith.cmpi eq, %22, %1 : vector<64x128xi32>
    %24 = arith.extui %23 : vector<64x128xi1> to vector<64x128xi32>
    %25 = arith.sitofp %24 : vector<64x128xi32> to vector<64x128xf32>
    %26 = arith.addf %18, %25 : vector<64x128xf32>
    %27 = vector.extract_strided_slice %0 {offsets = [3, 0], sizes = [1, 128], strides = [1, 1]} : vector<8x128xi32> to vector<1x128xi32>
    %28 = vector.shape_cast %27 : vector<1x128xi32> to vector<128xi32>
    %29 = vector.shape_cast %28 : vector<128xi32> to vector<1x128xi32>
    %30 = vector.broadcast %29 : vector<1x128xi32> to vector<64x128xi32>
    %31 = arith.cmpi eq, %30, %1 : vector<64x128xi32>
    %32 = arith.extui %31 : vector<64x128xi1> to vector<64x128xi32>
    %33 = arith.sitofp %32 : vector<64x128xi32> to vector<64x128xf32>
    %34 = arith.addf %26, %33 : vector<64x128xf32>
    %35 = vector.extract_strided_slice %0 {offsets = [4, 0], sizes = [1, 128], strides = [1, 1]} : vector<8x128xi32> to vector<1x128xi32>
    %36 = vector.shape_cast %35 : vector<1x128xi32> to vector<128xi32>
    %37 = vector.shape_cast %36 : vector<128xi32> to vector<1x128xi32>
    %38 = vector.broadcast %37 : vector<1x128xi32> to vector<64x128xi32>
    %39 = arith.cmpi eq, %38, %1 : vector<64x128xi32>
    %40 = arith.extui %39 : vector<64x128xi1> to vector<64x128xi32>
    %41 = arith.sitofp %40 : vector<64x128xi32> to vector<64x128xf32>
    %42 = arith.addf %34, %41 : vector<64x128xf32>
    %43 = vector.extract_strided_slice %0 {offsets = [5, 0], sizes = [1, 128], strides = [1, 1]} : vector<8x128xi32> to vector<1x128xi32>
    %44 = vector.shape_cast %43 : vector<1x128xi32> to vector<128xi32>
    %45 = vector.shape_cast %44 : vector<128xi32> to vector<1x128xi32>
    %46 = vector.broadcast %45 : vector<1x128xi32> to vector<64x128xi32>
    %47 = arith.cmpi eq, %46, %1 : vector<64x128xi32>
    %48 = arith.extui %47 : vector<64x128xi1> to vector<64x128xi32>
    %49 = arith.sitofp %48 : vector<64x128xi32> to vector<64x128xf32>
    %50 = arith.addf %42, %49 : vector<64x128xf32>
    %51 = vector.extract_strided_slice %0 {offsets = [6, 0], sizes = [1, 128], strides = [1, 1]} : vector<8x128xi32> to vector<1x128xi32>
    %52 = vector.shape_cast %51 : vector<1x128xi32> to vector<128xi32>
    %53 = vector.shape_cast %52 : vector<128xi32> to vector<1x128xi32>
    %54 = vector.broadcast %53 : vector<1x128xi32> to vector<64x128xi32>
    %55 = arith.cmpi eq, %54, %1 : vector<64x128xi32>
    %56 = arith.extui %55 : vector<64x128xi1> to vector<64x128xi32>
    %57 = arith.sitofp %56 : vector<64x128xi32> to vector<64x128xf32>
    %58 = arith.addf %50, %57 : vector<64x128xf32>
    %59 = vector.extract_strided_slice %0 {offsets = [7, 0], sizes = [1, 128], strides = [1, 1]} : vector<8x128xi32> to vector<1x128xi32>
    %60 = vector.shape_cast %59 : vector<1x128xi32> to vector<128xi32>
    %61 = vector.shape_cast %60 : vector<128xi32> to vector<1x128xi32>
    %62 = vector.broadcast %61 : vector<1x128xi32> to vector<64x128xi32>
    %63 = arith.cmpi eq, %62, %1 : vector<64x128xi32>
    %64 = arith.extui %63 : vector<64x128xi1> to vector<64x128xi32>
    %65 = arith.sitofp %64 : vector<64x128xi32> to vector<64x128xf32>
    %66 = arith.addf %58, %65 : vector<64x128xf32>
    %c0_1 = arith.constant 0 : index
    %c0_2 = arith.constant 0 : index
    %67 = vector.load %arg2[%c0_1, %c0_2] : memref<1x64xf32, #tpu.memory_space<vmem>>, vector<1x64xf32>
    %cst_3 = arith.constant dense<0.000000e+00> : vector<1x128xf32>
    %68 = tpu.matmul %67, %66, %cst_3 {dimension_numbers = #tpu.dot_dimension_numbers<[1], [0], [0], [1], [0, 0, 1, 1], [], []>, precision = #tpu.contract_precision<fp32>} : vector<1x64xf32>, vector<64x128xf32>, vector<1x128xf32> -> vector<1x128xf32>
    %c0_4 = arith.constant 0 : index
    %69 = memref.load %arg3[%c0_4] : memref<1xf32, #tpu.memory_space<smem>>
    %70 = vector.broadcast %69 : f32 to vector<1x128xf32>
    %71 = arith.addf %68, %70 : vector<1x128xf32>
    %c0_5 = arith.constant 0 : index
    %c0_6 = arith.constant 0 : index
    %72 = vector.load %arg4[%c0_5, %c0_6] : memref<1x128xf32, #tpu.memory_space<vmem>>, vector<1x128xf32>
    tpu.vector_store %arg4[%c0_5, %c0_6], %71 {strides = array<i32>} : memref<1x128xf32, #tpu.memory_space<vmem>>, vector<1x128xf32>,
    return
  }
  func.func @transform_0(%arg0: i32) -> (i32, i32) {
    %c0_i32 = arith.constant 0 : i32
    %c0_i32_0 = arith.constant 0 : i32
    return %c0_i32, %arg0 : i32, i32
  }
  func.func @transform_1(%arg0: i32) -> (i32, i32) {
    %c0_i32 = arith.constant 0 : i32
    %c0_i32_0 = arith.constant 0 : i32
    %c0_i32_1 = arith.constant 0 : i32
    return %c0_i32, %c0_i32_0 : i32, i32
  }
  func.func @transform_2(%arg0: i32) -> i32 {
    %c0_i32 = arith.constant 0 : i32
    %c0_i32_0 = arith.constant 0 : i32
    return %c0_i32 : i32
  }
  func.func @transform_3(%arg0: i32) -> (i32, i32) {
    %c0_i32 = arith.constant 0 : i32
    %c0_i32_0 = arith.constant 0 : i32
    return %c0_i32, %arg0 : i32, i32
  }
}

</mosaic_0001>

<llo_original>
// kernel: tpu_custom_call.1
$region0: #{tpu_custom_call.1}
  #allocation0 [shape = 'u32[]', space=smem, size = 0x4, offset = 0x4, fixed_abs, tag = 'smem constant byte address 0x4 - core index']
  #allocation1 [shape = 'u32[144,128]{1,0:T(1,128)}', space=vmem, size = 0x12000, scoped, tag = 'internal scratch']
  #allocation2 [shape = 'f32[1]{0:T(128)S(6)}', space=smem, size = 0x200, scoped, tag = 'scoped memory for tpu_custom_call.1']
  %s0 = inlined_call_operand.hbm [shape: s32[8,128], index: 0, kind: input, shape index: {}]
  %s1 = inlined_call_operand.vmem [shape: f32[1,64], index: 1, kind: input, shape index: {}]
  %s2 = inlined_call_operand.<no memory space> [shape: f32[1], index: 2, kind: input, shape index: {}]
  %s3 = inlined_call_operand.hbm [shape: f32[1,128], index: 3, kind: output, shape index: {}]
  %s4 = sld [smem:[#allocation0]]
  $region26: #{tpu_custom_call.1} parent=0
    _
  %s6 = ssub.s32 1, %s4
  %s7 = scalar_select 0, %s6, %s4
  %8 = sst [smem:[#allocation2]] %s2
  $region1: #{tpu_custom_call.1} parent=0
    #allocation3 [shape = 'u8[4096]{0}', space=vmem, size = 0x1000, scoped, tag = 'input window, operand 0, single buffered']
    #allocation4 [shape = 's32[1]{0}', space=sflag, size = 0x4, scoped, tag = 'scoped memory for tpu_custom_call.1']
    #allocation5 [shape = 's32[1]{0}', space=sflag, size = 0x4, scoped, tag = 'scoped memory for tpu_custom_call.1']
    #allocation6 [shape = 'u8[512]{0}', space=vmem, size = 0x400, scoped, tag = 'output window, operand 0, single buffered']
    %9 = vsyncpa [#allocation4], 0
    %10 = vsyncpa [#allocation5], 0
    // Predicated region
    $region2: #{tpu_custom_call.1} parent=1 // pred_check
      _
    $region3: #{tpu_custom_call.1} parent=1 // pred_check_branch
      %12 = sbr.rel (0) target = $region5
    $region4: #{tpu_custom_call.1} parent=1 // pred_region
      %s14 = ssub.s32 128, 128
      %15 = vsyncadd [#allocation4], %s14
      %s17 = sshll.u32 [#allocation3], 4
      %s18 = int_to_ptr.vmem [resolvable:$true] %s17
      %20 = dma.hbm_to_vmem [thread:$0]  %s0, 128, %s18, [#allocation4]
    $region5: #{tpu_custom_call.1} parent=1 // pred_fallthru
      _
    // Predicated region
    $region6: #{tpu_custom_call.1} parent=1 // pred_check
      _
    $region7: #{tpu_custom_call.1} parent=1 // pred_check_branch
      %22 = sbr.rel (0) target = $region9
    $region8: #{tpu_custom_call.1} parent=1 // pred_region
      _
    $region9: #{tpu_custom_call.1} parent=1 // pred_fallthru
      _
    // Predicated region
    $region10: #{tpu_custom_call.1} parent=1 // pred_check
      _
    $region11: #{tpu_custom_call.1} parent=1 // pred_check_branch
      %24 = sbr.rel (0) target = $region13
    $region12: #{tpu_custom_call.1} parent=1 // pred_region
      _
    $region13: #{tpu_custom_call.1} parent=1 // pred_fallthru
      _
    // Predicated region
    $region14: #{tpu_custom_call.1} parent=1 // pred_check
      _
    $region15: #{tpu_custom_call.1} parent=1 // pred_check_branch
      %26 = sbr.rel (0) target = $region17
    $region16: #{tpu_custom_call.1} parent=1 // pred_region
      %27 = dma.done [#allocation4], 128
    $region17: #{tpu_custom_call.1} parent=1 // pred_fallthru
      _
    %v28 = vld [vmem:[#allocation3] sm:$0xff]
    %v29 = vlaneseq
    %v30 = vshrl.u32 %v29, 7
    %v31 = vadd.s32 %v30, 8
    %v32 = vadd.s32 %v30, 16
    %v33 = vadd.s32 %v30, 24
    %v34 = vadd.s32 %v30, 32
    %v35 = vadd.s32 %v30, 40
    %v36 = vadd.s32 %v30, 48
    %v37 = vadd.s32 %v30, 56
    %v38 = vlaneseq
    %v39 = vshrl.u32 %v38, 7
    %v40 = vsub.s32 0, %v39
    %v41 = vrot.slane %v28, %v40
    %vm42 = vcmp.eq.s32.totalorder %v41, %v30
    %vm43 = vcmp.eq.s32.totalorder %v41, %v31
    %vm44 = vcmp.eq.s32.totalorder %v41, %v32
    %vm45 = vcmp.eq.s32.totalorder %v41, %v33
    %vm46 = vcmp.eq.s32.totalorder %v41, %v34
    %vm47 = vcmp.eq.s32.totalorder %v41, %v35
    %vm48 = vcmp.eq.s32.totalorder %v41, %v36
    %vm49 = vcmp.eq.s32.totalorder %v41, %v37
    %v50 = vsel %vm42, 1, 0
    %v51 = vsel %vm43, 1, 0
    %v52 = vsel %vm44, 1, 0
    %v53 = vsel %vm45, 1, 0
    %v54 = vsel %vm46, 1, 0
    %v55 = vsel %vm47, 1, 0
    %v56 = vsel %vm48, 1, 0
    %v57 = vsel %vm49, 1, 0
    %v58 = vcvt.s32.f32 %v50
    %v59 = vcvt.s32.f32 %v51
    %v60 = vcvt.s32.f32 %v52
    %v61 = vcvt.s32.f32 %v53
    %v62 = vcvt.s32.f32 %v54
    %v63 = vcvt.s32.f32 %v55
    %v64 = vcvt.s32.f32 %v56
    %v65 = vcvt.s32.f32 %v57
    %v66 = vadd.f32 %v58, 0.0
    %v67 = vadd.f32 %v59, 0.0
    %v68 = vadd.f32 %v60, 0.0
    %v69 = vadd.f32 %v61, 0.0
    %v70 = vadd.f32 %v62, 0.0
    %v71 = vadd.f32 %v63, 0.0
    %v72 = vadd.f32 %v64, 0.0
    %v73 = vadd.f32 %v65, 0.0
    %v74 = vlaneseq
    %v75 = vshrl.u32 %v74, 7
    %v76 = vsub.s32 1, %v75
    %v77 = vrot.slane %v28, %v76
    %vm78 = vcmp.eq.s32.totalorder %v77, %v30
    %vm79 = vcmp.eq.s32.totalorder %v77, %v31
    %vm80 = vcmp.eq.s32.totalorder %v77, %v32
    %vm81 = vcmp.eq.s32.totalorder %v77, %v33
    %vm82 = vcmp.eq.s32.totalorder %v77, %v34
    %vm83 = vcmp.eq.s32.totalorder %v77, %v35
    %vm84 = vcmp.eq.s32.totalorder %v77, %v36
    %vm85 = vcmp.eq.s32.totalorder %v77, %v37
    %v86 = vsel %vm78, 1, 0
    %v87 = vsel %vm79, 1, 0
    %v88 = vsel %vm80, 1, 0
    %v89 = vsel %vm81, 1, 0
    %v90 = vsel %vm82, 1, 0
    %v91 = vsel %vm83, 1, 0
    %v92 = vsel %vm84, 1, 0
    %v93 = vsel %vm85, 1, 0
    %v94 = vcvt.s32.f32 %v86
    %v95 = vcvt.s32.f32 %v87
    %v96 = vcvt.s32.f32 %v88
    %v97 = vcvt.s32.f32 %v89
    %v98 = vcvt.s32.f32 %v90
    %v99 = vcvt.s32.f32 %v91
    %v100 = vcvt.s32.f32 %v92
    %v101 = vcvt.s32.f32 %v93
    %v102 = vadd.f32 %v66, %v94
    %v103 = vadd.f32 %v67, %v95
    %v104 = vadd.f32 %v68, %v96
    %v105 = vadd.f32 %v69, %v97
    %v106 = vadd.f32 %v70, %v98
    %v107 = vadd.f32 %v71, %v99
    %v108 = vadd.f32 %v72, %v100
    %v109 = vadd.f32 %v73, %v101
    %v110 = vlaneseq
    %v111 = vshrl.u32 %v110, 7
    %v112 = vsub.s32 2, %v111
    %v113 = vrot.slane %v28, %v112
    %vm114 = vcmp.eq.s32.totalorder %v113, %v30
    %vm115 = vcmp.eq.s32.totalorder %v113, %v31
    %vm116 = vcmp.eq.s32.totalorder %v113, %v32
    %vm117 = vcmp.eq.s32.totalorder %v113, %v33
    %vm118 = vcmp.eq.s32.totalorder %v113, %v34
    %vm119 = vcmp.eq.s32.totalorder %v113, %v35
    %vm120 = vcmp.eq.s32.totalorder %v113, %v36
    %vm121 = vcmp.eq.s32.totalorder %v113, %v37
    %v122 = vsel %vm114, 1, 0
    %v123 = vsel %vm115, 1, 0
    %v124 = vsel %vm116, 1, 0
    %v125 = vsel %vm117, 1, 0
    %v126 = vsel %vm118, 1, 0
    %v127 = vsel %vm119, 1, 0
    %v128 = vsel %vm120, 1, 0
    %v129 = vsel %vm121, 1, 0
    %v130 = vcvt.s32.f32 %v122
    %v131 = vcvt.s32.f32 %v123
    %v132 = vcvt.s32.f32 %v124
    %v133 = vcvt.s32.f32 %v125
    %v134 = vcvt.s32.f32 %v126
    %v135 = vcvt.s32.f32 %v127
    %v136 = vcvt.s32.f32 %v128
    %v137 = vcvt.s32.f32 %v129
    %v138 = vadd.f32 %v102, %v130
    %v139 = vadd.f32 %v103, %v131
    %v140 = vadd.f32 %v104, %v132
    %v141 = vadd.f32 %v105, %v133
    %v142 = vadd.f32 %v106, %v134
    %v143 = vadd.f32 %v107, %v135
    %v144 = vadd.f32 %v108, %v136
    %v145 = vadd.f32 %v109, %v137
    %v146 = vlaneseq
    %v147 = vshrl.u32 %v146, 7
    %v148 = vsub.s32 3, %v147
    %v149 = vrot.slane %v28, %v148
    %vm150 = vcmp.eq.s32.totalorder %v149, %v30
    %vm151 = vcmp.eq.s32.totalorder %v149, %v31
    %vm152 = vcmp.eq.s32.totalorder %v149, %v32
    %vm153 = vcmp.eq.s32.totalorder %v149, %v33
    %vm154 = vcmp.eq.s32.totalorder %v149, %v34
    %vm155 = vcmp.eq.s32.totalorder %v149, %v35
    %vm156 = vcmp.eq.s32.totalorder %v149, %v36
    %vm157 = vcmp.eq.s32.totalorder %v149, %v37
    %v158 = vsel %vm150, 1, 0
    %v159 = vsel %vm151, 1, 0
    %v160 = vsel %vm152, 1, 0
    %v161 = vsel %vm153, 1, 0
    %v162 = vsel %vm154, 1, 0
    %v163 = vsel %vm155, 1, 0
    %v164 = vsel %vm156, 1, 0
    %v165 = vsel %vm157, 1, 0
    %v166 = vcvt.s32.f32 %v158
    %v167 = vcvt.s32.f32 %v159
    %v168 = vcvt.s32.f32 %v160
    %v169 = vcvt.s32.f32 %v161
    %v170 = vcvt.s32.f32 %v162
    %v171 = vcvt.s32.f32 %v163
    %v172 = vcvt.s32.f32 %v164
    %v173 = vcvt.s32.f32 %v165
    %v174 = vadd.f32 %v138, %v166
    %v175 = vadd.f32 %v139, %v167
    %v176 = vadd.f32 %v140, %v168
    %v177 = vadd.f32 %v141, %v169
    %v178 = vadd.f32 %v142, %v170
    %v179 = vadd.f32 %v143, %v171
    %v180 = vadd.f32 %v144, %v172
    %v181 = vadd.f32 %v145, %v173
    %v182 = vlaneseq
    %v183 = vshrl.u32 %v182, 7
    %v184 = vsub.s32 4, %v183
    %v185 = vrot.slane %v28, %v184
    %vm186 = vcmp.eq.s32.totalorder %v185, %v30
    %vm187 = vcmp.eq.s32.totalorder %v185, %v31
    %vm188 = vcmp.eq.s32.totalorder %v185, %v32
    %vm189 = vcmp.eq.s32.totalorder %v185, %v33
    %vm190 = vcmp.eq.s32.totalorder %v185, %v34
    %vm191 = vcmp.eq.s32.totalorder %v185, %v35
    %vm192 = vcmp.eq.s32.totalorder %v185, %v36
    %vm193 = vcmp.eq.s32.totalorder %v185, %v37
    %v194 = vsel %vm186, 1, 0
    %v195 = vsel %vm187, 1, 0
    %v196 = vsel %vm188, 1, 0
    %v197 = vsel %vm189, 1, 0
    %v198 = vsel %vm190, 1, 0
    %v199 = vsel %vm191, 1, 0
    %v200 = vsel %vm192, 1, 0
    %v201 = vsel %vm193, 1, 0
    %v202 = vcvt.s32.f32 %v194
    %v203 = vcvt.s32.f32 %v195
    %v204 = vcvt.s32.f32 %v196
    %v205 = vcvt.s32.f32 %v197
    %v206 = vcvt.s32.f32 %v198
    %v207 = vcvt.s32.f32 %v199
    %v208 = vcvt.s32.f32 %v200
    %v209 = vcvt.s32.f32 %v201
    %v210 = vadd.f32 %v174, %v202
    %v211 = vadd.f32 %v175, %v203
    %v212 = vadd.f32 %v176, %v204
    %v213 = vadd.f32 %v177, %v205
    %v214 = vadd.f32 %v178, %v206
    %v215 = vadd.f32 %v179, %v207
    %v216 = vadd.f32 %v180, %v208
    %v217 = vadd.f32 %v181, %v209
    %v218 = vlaneseq
    %v219 = vshrl.u32 %v218, 7
    %v220 = vsub.s32 5, %v219
    %v221 = vrot.slane %v28, %v220
    %vm222 = vcmp.eq.s32.totalorder %v221, %v30
    %vm223 = vcmp.eq.s32.totalorder %v221, %v31
    %vm224 = vcmp.eq.s32.totalorder %v221, %v32
    %vm225 = vcmp.eq.s32.totalorder %v221, %v33
    %vm226 = vcmp.eq.s32.totalorder %v221, %v34
    %vm227 = vcmp.eq.s32.totalorder %v221, %v35
    %vm228 = vcmp.eq.s32.totalorder %v221, %v36
    %vm229 = vcmp.eq.s32.totalorder %v221, %v37
    %v230 = vsel %vm222, 1, 0
    %v231 = vsel %vm223, 1, 0
    %v232 = vsel %vm224, 1, 0
    %v233 = vsel %vm225, 1, 0
    %v234 = vsel %vm226, 1, 0
    %v235 = vsel %vm227, 1, 0
    %v236 = vsel %vm228, 1, 0
    %v237 = vsel %vm229, 1, 0
    %v238 = vcvt.s32.f32 %v230
    %v239 = vcvt.s32.f32 %v231
    %v240 = vcvt.s32.f32 %v232
    %v241 = vcvt.s32.f32 %v233
    %v242 = vcvt.s32.f32 %v234
    %v243 = vcvt.s32.f32 %v235
    %v244 = vcvt.s32.f32 %v236
    %v245 = vcvt.s32.f32 %v237
    %v246 = vadd.f32 %v210, %v238
    %v247 = vadd.f32 %v211, %v239
    %v248 = vadd.f32 %v212, %v240
    %v249 = vadd.f32 %v213, %v241
    %v250 = vadd.f32 %v214, %v242
    %v251 = vadd.f32 %v215, %v243
    %v252 = vadd.f32 %v216, %v244
    %v253 = vadd.f32 %v217, %v245
    %v254 = vlaneseq
    %v255 = vshrl.u32 %v254, 7
    %v256 = vsub.s32 6, %v255
    %v257 = vrot.slane %v28, %v256
    %vm258 = vcmp.eq.s32.totalorder %v257, %v30
    %vm259 = vcmp.eq.s32.totalorder %v257, %v31
    %vm260 = vcmp.eq.s32.totalorder %v257, %v32
    %vm261 = vcmp.eq.s32.totalorder %v257, %v33
    %vm262 = vcmp.eq.s32.totalorder %v257, %v34
    %vm263 = vcmp.eq.s32.totalorder %v257, %v35
    %vm264 = vcmp.eq.s32.totalorder %v257, %v36
    %vm265 = vcmp.eq.s32.totalorder %v257, %v37
    %v266 = vsel %vm258, 1, 0
    %v267 = vsel %vm259, 1, 0
    %v268 = vsel %vm260, 1, 0
    %v269 = vsel %vm261, 1, 0
    %v270 = vsel %vm262, 1, 0
    %v271 = vsel %vm263, 1, 0
    %v272 = vsel %vm264, 1, 0
    %v273 = vsel %vm265, 1, 0
    %v274 = vcvt.s32.f32 %v266
    %v275 = vcvt.s32.f32 %v267
    %v276 = vcvt.s32.f32 %v268
    %v277 = vcvt.s32.f32 %v269
    %v278 = vcvt.s32.f32 %v270
    %v279 = vcvt.s32.f32 %v271
    %v280 = vcvt.s32.f32 %v272
    %v281 = vcvt.s32.f32 %v273
    %v282 = vadd.f32 %v246, %v274
    %v283 = vadd.f32 %v247, %v275
    %v284 = vadd.f32 %v248, %v276
    %v285 = vadd.f32 %v249, %v277
    %v286 = vadd.f32 %v250, %v278
    %v287 = vadd.f32 %v251, %v279
    %v288 = vadd.f32 %v252, %v280
    %v289 = vadd.f32 %v253, %v281
    %v290 = vlaneseq
    %v291 = vshrl.u32 %v290, 7
    %v292 = vsub.s32 7, %v291
    %v293 = vrot.slane %v28, %v292
    %vm294 = vcmp.eq.s32.totalorder %v293, %v30
    %vm295 = vcmp.eq.s32.totalorder %v293, %v31
    %vm296 = vcmp.eq.s32.totalorder %v293, %v32
    %vm297 = vcmp.eq.s32.totalorder %v293, %v33
    %vm298 = vcmp.eq.s32.totalorder %v293, %v34
    %vm299 = vcmp.eq.s32.totalorder %v293, %v35
    %vm300 = vcmp.eq.s32.totalorder %v293, %v36
    %vm301 = vcmp.eq.s32.totalorder %v293, %v37
    %v302 = vsel %vm294, 1, 0
    %v303 = vsel %vm295, 1, 0
    %v304 = vsel %vm296, 1, 0
    %v305 = vsel %vm297, 1, 0
    %v306 = vsel %vm298, 1, 0
    %v307 = vsel %vm299, 1, 0
    %v308 = vsel %vm300, 1, 0
    %v309 = vsel %vm301, 1, 0
    %v310 = vcvt.s32.f32 %v302
    %v311 = vcvt.s32.f32 %v303
    %v312 = vcvt.s32.f32 %v304
    %v313 = vcvt.s32.f32 %v305
    %v314 = vcvt.s32.f32 %v306
    %v315 = vcvt.s32.f32 %v307
    %v316 = vcvt.s32.f32 %v308
    %v317 = vcvt.s32.f32 %v309
    %v318 = vadd.f32 %v282, %v310
    %v319 = vadd.f32 %v283, %v311
    %v320 = vadd.f32 %v284, %v312
    %v321 = vadd.f32 %v285, %v313
    %v322 = vadd.f32 %v286, %v314
    %v323 = vadd.f32 %v287, %v315
    %v324 = vadd.f32 %v288, %v316
    %v325 = vadd.f32 %v289, %v317
    %v326 = vld [vmem:[%s1] sm:$0x1]
    %s327 = sld [smem:[#allocation2]]
    %v328 = vstv %s327
    %vm329 = vcmask 523264
    %v331 = vsel %vm329, %v326, 0
    %333 = vmatprep.subr.mxu0 0.0
    %v334 = vand.u32 %v318, 4294901760
    %335 = vmatpush1.msra.mxu0 %v334
    %336 = vmatprep.subr.mxu0 0.0
    %v337 = vand.u32 %v319, 4294901760
    %338 = vmatpush1.msra.mxu0 %v337
    %339 = vmatprep.subr.mxu0 0.0
    %v340 = vand.u32 %v320, 4294901760
    %341 = vmatpush1.msra.mxu0 %v340
    %342 = vmatprep.subr.mxu0 0.0
    %v343 = vand.u32 %v321, 4294901760
    %344 = vmatpush1.msra.mxu0 %v343
    %345 = vmatprep.subr.mxu0 0.0
    %v346 = vand.u32 %v322, 4294901760
    %347 = vmatpush1.msra.mxu0 %v346
    %348 = vmatprep.subr.mxu0 0.0
    %v349 = vand.u32 %v323, 4294901760
    %350 = vmatpush1.msra.mxu0 %v349
    %351 = vmatprep.subr.mxu0 0.0
    %v352 = vand.u32 %v324, 4294901760
    %353 = vmatpush1.msra.mxu0 %v352
    %354 = vmatprep.subr.mxu0 0.0
    %v355 = vand.u32 %v325, 4294901760
    %356 = vmatpush1.msra.mxu0 %v355
    %357 = vmatprep.subr.mxu0 0.0
    %358 = vmatpush1.msra.mxu0 0.0
    %359 = vmatprep.subr.mxu0 0.0
    %360 = vmatpush1.msra.mxu0 0.0
    %361 = vmatprep.subr.mxu0 0.0
    %362 = vmatpush1.msra.mxu0 0.0
    %363 = vmatprep.subr.mxu0 0.0
    %364 = vmatpush1.msra.mxu0 0.0
    %365 = vmatprep.subr.mxu0 0.0
    %366 = vmatpush1.msra.mxu0 0.0
    %367 = vmatprep.subr.mxu0 0.0
    %368 = vmatpush1.msra.mxu0 0.0
    %369 = vmatprep.subr.mxu0 0.0
    %370 = vmatpush1.msra.mxu0 0.0
    %371 = vmatprep.subr.mxu0 0.0
    %372 = vmatpush1.msra.mxu0 0.0
    %373 = vmatprep.subr.mxu0 0.0
    %374 = vmatpush1.msra.mxu0 0.0
    %375 = vmatprep.subr.mxu0 0.0
    %376 = vmatpush1.msra.mxu0 0.0
    %377 = vmatprep.subr.mxu0 0.0
    %378 = vmatpush1.msra.mxu0 0.0
    %379 = vmatprep.subr.mxu0 0.0
    %380 = vmatpush1.msra.mxu0 0.0
    %381 = vmatprep.subr.mxu0 0.0
    %382 = vmatpush1.msra.mxu0 0.0
    %383 = vmatprep.subr.mxu0 0.0
    %384 = vmatpush1.msra.mxu0 0.0
    %385 = vmatprep.subr.mxu0 0.0
    %386 = vmatpush1.msra.mxu0 0.0
    %387 = vmatprep.subr.mxu0 0.0
    %388 = vmatpush1.msra.mxu0 0.0
    %389 = vmatprep.subr.mxu0 0.0
    %390 = vmatpush1.msra.mxu0 0.0
    %391 = vmatprep.subr.mxu0 0.0
    %392 = vmatpush1.msra.mxu0 0.0
    %393 = vmatprep.subr.mxu0 0.0
    %394 = vmatpush1.msra.mxu0 0.0
    %395 = vmatprep.subr.mxu0 0.0
    %396 = vmatpush1.msra.mxu0 0.0
    %397 = vmatprep.subr.mxu0 0.0
    %398 = vmatpush1.msra.mxu0 0.0
    %399 = vmatprep.subr.mxu0 0.0
    %400 = vmatpush1.msra.mxu0 0.0
    %401 = vmatprep.subr.mxu0 0.0
    %402 = vmatpush1.msra.mxu0 0.0
    %403 = vmatprep.subr.mxu0 0.0
    %404 = vmatpush1.msra.mxu0 0.0
    %405 = vmatprep.mubr.f32.mxu0 0.0
    %v406 = vand.u32 %v331, 4294901760
    %v407 = vsub.f32 %v331, %v406
    %v408 = vand.u32 %v407, 4294901760
    %v409 = vsub.f32 %v407, %v408
    %v410 = vand.u32 %v409, 4294901760
    %411 = vmatmul.mubr.f32.gmra.mrb[0].mxu0 %v410
    %v412 = vpop.f32.mrb[0].mxu0
    %v413 = vadd.f32 %v328, %v412
    %v414 = vpop.f32.mrb[0].mxu0
    %415 = vdwg.mxu0
    %416 = vmatprep.subr.mxu0 0.0
    %v417 = vand.u32 %v318, 4294901760
    %v418 = vsub.f32 %v318, %v417
    %v419 = vand.u32 %v418, 4294901760
    %v420 = vsub.f32 %v418, %v419
    %v421 = vand.u32 %v420, 4294901760
    %422 = vmatpush1.msra.mxu0 %v421
    %423 = vmatprep.subr.mxu0 0.0
    %v424 = vand.u32 %v319, 4294901760
    %v425 = vsub.f32 %v319, %v424
    %v426 = vand.u32 %v425, 4294901760
    %v427 = vsub.f32 %v425, %v426
    %v428 = vand.u32 %v427, 4294901760
    %429 = vmatpush1.msra.mxu0 %v428
    %430 = vmatprep.subr.mxu0 0.0
    %v431 = vand.u32 %v320, 4294901760
    %v432 = vsub.f32 %v320, %v431
    %v433 = vand.u32 %v432, 4294901760
    %v434 = vsub.f32 %v432, %v433
    %v435 = vand.u32 %v434, 4294901760
    %436 = vmatpush1.msra.mxu0 %v435
    %437 = vmatprep.subr.mxu0 0.0
    %v438 = vand.u32 %v321, 4294901760
    %v439 = vsub.f32 %v321, %v438
    %v440 = vand.u32 %v439, 4294901760
    %v441 = vsub.f32 %v439, %v440
    %v442 = vand.u32 %v441, 4294901760
    %443 = vmatpush1.msra.mxu0 %v442
    %444 = vmatprep.subr.mxu0 0.0
    %v445 = vand.u32 %v322, 4294901760
    %v446 = vsub.f32 %v322, %v445
    %v447 = vand.u32 %v446, 4294901760
    %v448 = vsub.f32 %v446, %v447
    %v449 = vand.u32 %v448, 4294901760
    %450 = vmatpush1.msra.mxu0 %v449
    %451 = vmatprep.subr.mxu0 0.0
    %v452 = vand.u32 %v323, 4294901760
    %v453 = vsub.f32 %v323, %v452
    %v454 = vand.u32 %v453, 4294901760
    %v455 = vsub.f32 %v453, %v454
    %v456 = vand.u32 %v455, 4294901760
    %457 = vmatpush1.msra.mxu0 %v456
    %458 = vmatprep.subr.mxu0 0.0
    %v459 = vand.u32 %v324, 4294901760
    %v460 = vsub.f32 %v324, %v459
    %v461 = vand.u32 %v460, 4294901760
    %v462 = vsub.f32 %v460, %v461
    %v463 = vand.u32 %v462, 4294901760
    %464 = vmatpush1.msra.mxu0 %v463
    %465 = vmatprep.subr.mxu0 0.0
    %v466 = vand.u32 %v325, 4294901760
    %v467 = vsub.f32 %v325, %v466
    %v468 = vand.u32 %v467, 4294901760
    %v469 = vsub.f32 %v467, %v468
    %v470 = vand.u32 %v469, 4294901760
    %471 = vmatpush1.msra.mxu0 %v470
    %472 = vmatprep.subr.mxu0 0.0
    %473 = vmatpush1.msra.mxu0 0.0
    %474 = vmatprep.subr.mxu0 0.0
    %475 = vmatpush1.msra.mxu0 0.0
    %476 = vmatprep.subr.mxu0 0.0
    %477 = vmatpush1.msra.mxu0 0.0
    %478 = vmatprep.subr.mxu0 0.0
    %479 = vmatpush1.msra.mxu0 0.0
    %480 = vmatprep.subr.mxu0 0.0
    %481 = vmatpush1.msra.mxu0 0.0
    %482 = vmatprep.subr.mxu0 0.0
    %483 = vmatpush1.msra.mxu0 0.0
    %484 = vmatprep.subr.mxu0 0.0
    %485 = vmatpush1.msra.mxu0 0.0
    %486 = vmatprep.subr.mxu0 0.0
    %487 = vmatpush1.msra.mxu0 0.0
    %488 = vmatprep.subr.mxu0 0.0
    %489 = vmatpush1.msra.mxu0 0.0
    %490 = vmatprep.subr.mxu0 0.0
    %491 = vmatpush1.msra.mxu0 0.0
    %492 = vmatprep.subr.mxu0 0.0
    %493 = vmatpush1.msra.mxu0 0.0
    %494 = vmatprep.subr.mxu0 0.0
    %495 = vmatpush1.msra.mxu0 0.0
    %496 = vmatprep.subr.mxu0 0.0
    %497 = vmatpush1.msra.mxu0 0.0
    %498 = vmatprep.subr.mxu0 0.0
    %499 = vmatpush1.msra.mxu0 0.0
    %500 = vmatprep.subr.mxu0 0.0
    %501 = vmatpush1.msra.mxu0 0.0
    %502 = vmatprep.subr.mxu0 0.0
    %503 = vmatpush1.msra.mxu0 0.0
    %504 = vmatprep.subr.mxu0 0.0
    %505 = vmatpush1.msra.mxu0 0.0
    %506 = vmatprep.subr.mxu0 0.0
    %507 = vmatpush1.msra.mxu0 0.0
    %508 = vmatprep.subr.mxu0 0.0
    %509 = vmatpush1.msra.mxu0 0.0
    %510 = vmatprep.subr.mxu0 0.0
    %511 = vmatpush1.msra.mxu0 0.0
    %512 = vmatprep.subr.mxu0 0.0
    %513 = vmatpush1.msra.mxu0 0.0
    %514 = vmatprep.subr.mxu0 0.0
    %515 = vmatpush1.msra.mxu0 0.0
    %516 = vmatprep.subr.mxu0 0.0
    %517 = vmatpush1.msra.mxu0 0.0
    %518 = vmatprep.subr.mxu0 0.0
    %519 = vmatpush1.msra.mxu0 0.0
    %520 = vmatprep.mubr.f32.mxu0 0.0
    %v521 = vand.u32 %v331, 4294901760
    %522 = vmatmul.mubr.f32.gmra.mrb[0].mxu0 %v521
    %v523 = vpop.f32.mrb[0].mxu0
    %v524 = vadd.f32 %v413, %v523
    %v525 = vpop.f32.mrb[0].mxu0
    %526 = vdwg.mxu0
    %527 = vmatprep.subr.mxu0 0.0
    %v528 = vand.u32 %v318, 4294901760
    %v529 = vsub.f32 %v318, %v528
    %530 = vmatpush1.msra.mxu0 %v529
    %531 = vmatprep.subr.mxu0 0.0
    %v532 = vand.u32 %v319, 4294901760
    %v533 = vsub.f32 %v319, %v532
    %534 = vmatpush1.msra.mxu0 %v533
    %535 = vmatprep.subr.mxu0 0.0
    %v536 = vand.u32 %v320, 4294901760
    %v537 = vsub.f32 %v320, %v536
    %538 = vmatpush1.msra.mxu0 %v537
    %539 = vmatprep.subr.mxu0 0.0
    %v540 = vand.u32 %v321, 4294901760
    %v541 = vsub.f32 %v321, %v540
    %542 = vmatpush1.msra.mxu0 %v541
    %543 = vmatprep.subr.mxu0 0.0
    %v544 = vand.u32 %v322, 4294901760
    %v545 = vsub.f32 %v322, %v544
    %546 = vmatpush1.msra.mxu0 %v545
    %547 = vmatprep.subr.mxu0 0.0
    %v548 = vand.u32 %v323, 4294901760
    %v549 = vsub.f32 %v323, %v548
    %550 = vmatpush1.msra.mxu0 %v549
    %551 = vmatprep.subr.mxu0 0.0
    %v552 = vand.u32 %v324, 4294901760
    %v553 = vsub.f32 %v324, %v552
    %554 = vmatpush1.msra.mxu0 %v553
    %555 = vmatprep.subr.mxu0 0.0
    %v556 = vand.u32 %v325, 4294901760
    %v557 = vsub.f32 %v325, %v556
    %558 = vmatpush1.msra.mxu0 %v557
    %559 = vmatprep.subr.mxu0 0.0
    %560 = vmatpush1.msra.mxu0 0.0
    %561 = vmatprep.subr.mxu0 0.0
    %562 = vmatpush1.msra.mxu0 0.0
    %563 = vmatprep.subr.mxu0 0.0
    %564 = vmatpush1.msra.mxu0 0.0
    %565 = vmatprep.subr.mxu0 0.0
    %566 = vmatpush1.msra.mxu0 0.0
    %567 = vmatprep.subr.mxu0 0.0
    %568 = vmatpush1.msra.mxu0 0.0
    %569 = vmatprep.subr.mxu0 0.0
    %570 = vmatpush1.msra.mxu0 0.0
    %571 = vmatprep.subr.mxu0 0.0
    %572 = vmatpush1.msra.mxu0 0.0
    %573 = vmatprep.subr.mxu0 0.0
    %574 = vmatpush1.msra.mxu0 0.0
    %575 = vmatprep.subr.mxu0 0.0
    %576 = vmatpush1.msra.mxu0 0.0
    %577 = vmatprep.subr.mxu0 0.0
    %578 = vmatpush1.msra.mxu0 0.0
    %579 = vmatprep.subr.mxu0 0.0
    %580 = vmatpush1.msra.mxu0 0.0
    %581 = vmatprep.subr.mxu0 0.0
    %582 = vmatpush1.msra.mxu0 0.0
    %583 = vmatprep.subr.mxu0 0.0
    %584 = vmatpush1.msra.mxu0 0.0
    %585 = vmatprep.subr.mxu0 0.0
    %586 = vmatpush1.msra.mxu0 0.0
    %587 = vmatprep.subr.mxu0 0.0
    %588 = vmatpush1.msra.mxu0 0.0
    %589 = vmatprep.subr.mxu0 0.0
    %590 = vmatpush1.msra.mxu0 0.0
    %591 = vmatprep.subr.mxu0 0.0
    %592 = vmatpush1.msra.mxu0 0.0
    %593 = vmatprep.subr.mxu0 0.0
    %594 = vmatpush1.msra.mxu0 0.0
    %595 = vmatprep.subr.mxu0 0.0
    %596 = vmatpush1.msra.mxu0 0.0
    %597 = vmatprep.subr.mxu0 0.0
    %598 = vmatpush1.msra.mxu0 0.0
    %599 = vmatprep.subr.mxu0 0.0
    %600 = vmatpush1.msra.mxu0 0.0
    %601 = vmatprep.subr.mxu0 0.0
    %602 = vmatpush1.msra.mxu0 0.0
    %603 = vmatprep.subr.mxu0 0.0
    %604 = vmatpush1.msra.mxu0 0.0
    %605 = vmatprep.subr.mxu0 0.0
    %606 = vmatpush1.msra.mxu0 0.0
    %607 = vmatprep.mubr.f32.mxu0 0.0
    %v608 = vand.u32 %v331, 4294901760
    %v609 = vsub.f32 %v331, %v608
    %610 = vmatmul.mubr.f32.gmra.mrb[0].mxu0 %v609
    %v611 = vpop.f32.mrb[0].mxu0
    %v612 = vadd.f32 %v524, %v611
    %v613 = vpop.f32.mrb[0].mxu0
    %614 = vdwg.mxu0
    %615 = vmatprep.subr.mxu0 0.0
    %v616 = vand.u32 %v318, 4294901760
    %617 = vmatpush1.msra.mxu0 %v616
    %618 = vmatprep.subr.mxu0 0.0
    %v619 = vand.u32 %v319, 4294901760
    %620 = vmatpush1.msra.mxu0 %v619
    %621 = vmatprep.subr.mxu0 0.0
    %v622 = vand.u32 %v320, 4294901760
    %623 = vmatpush1.msra.mxu0 %v622
    %624 = vmatprep.subr.mxu0 0.0
    %v625 = vand.u32 %v321, 4294901760
    %626 = vmatpush1.msra.mxu0 %v625
    %627 = vmatprep.subr.mxu0 0.0
    %v628 = vand.u32 %v322, 4294901760
    %629 = vmatpush1.msra.mxu0 %v628
    %630 = vmatprep.subr.mxu0 0.0
    %v631 = vand.u32 %v323, 4294901760
    %632 = vmatpush1.msra.mxu0 %v631
    %633 = vmatprep.subr.mxu0 0.0
    %v634 = vand.u32 %v324, 4294901760
    %635 = vmatpush1.msra.mxu0 %v634
    %636 = vmatprep.subr.mxu0 0.0
    %v637 = vand.u32 %v325, 4294901760
    %638 = vmatpush1.msra.mxu0 %v637
    %639 = vmatprep.subr.mxu0 0.0
    %640 = vmatpush1.msra.mxu0 0.0
    %641 = vmatprep.subr.mxu0 0.0
    %642 = vmatpush1.msra.mxu0 0.0
    %643 = vmatprep.subr.mxu0 0.0
    %644 = vmatpush1.msra.mxu0 0.0
    %645 = vmatprep.subr.mxu0 0.0
    %646 = vmatpush1.msra.mxu0 0.0
    %647 = vmatprep.subr.mxu0 0.0
    %648 = vmatpush1.msra.mxu0 0.0
    %649 = vmatprep.subr.mxu0 0.0
    %650 = vmatpush1.msra.mxu0 0.0
    %651 = vmatprep.subr.mxu0 0.0
    %652 = vmatpush1.msra.mxu0 0.0
    %653 = vmatprep.subr.mxu0 0.0
    %654 = vmatpush1.msra.mxu0 0.0
    %655 = vmatprep.subr.mxu0 0.0
    %656 = vmatpush1.msra.mxu0 0.0
    %657 = vmatprep.subr.mxu0 0.0
    %658 = vmatpush1.msra.mxu0 0.0
    %659 = vmatprep.subr.mxu0 0.0
    %660 = vmatpush1.msra.mxu0 0.0
    %661 = vmatprep.subr.mxu0 0.0
    %662 = vmatpush1.msra.mxu0 0.0
    %663 = vmatprep.subr.mxu0 0.0
    %664 = vmatpush1.msra.mxu0 0.0
    %665 = vmatprep.subr.mxu0 0.0
    %666 = vmatpush1.msra.mxu0 0.0
    %667 = vmatprep.subr.mxu0 0.0
    %668 = vmatpush1.msra.mxu0 0.0
    %669 = vmatprep.subr.mxu0 0.0
    %670 = vmatpush1.msra.mxu0 0.0
    %671 = vmatprep.subr.mxu0 0.0
    %672 = vmatpush1.msra.mxu0 0.0
    %673 = vmatprep.subr.mxu0 0.0
    %674 = vmatpush1.msra.mxu0 0.0
    %675 = vmatprep.subr.mxu0 0.0
    %676 = vmatpush1.msra.mxu0 0.0
    %677 = vmatprep.subr.mxu0 0.0
    %678 = vmatpush1.msra.mxu0 0.0
    %679 = vmatprep.subr.mxu0 0.0
    %680 = vmatpush1.msra.mxu0 0.0
    %681 = vmatprep.subr.mxu0 0.0
    %682 = vmatpush1.msra.mxu0 0.0
    %683 = vmatprep.subr.mxu0 0.0
    %684 = vmatpush1.msra.mxu0 0.0
    %685 = vmatprep.subr.mxu0 0.0
    %686 = vmatpush1.msra.mxu0 0.0
    %687 = vmatprep.mubr.f32.mxu0 0.0
    %v688 = vand.u32 %v331, 4294901760
    %v689 = vsub.f32 %v331, %v688
    %v690 = vand.u32 %v689, 4294901760
    %691 = vmatmul.mubr.f32.gmra.mrb[0].mxu0 %v690
    %v692 = vpop.f32.mrb[0].mxu0
    %v693 = vadd.f32 %v612, %v692
    %v694 = vpop.f32.mrb[0].mxu0
    %695 = vdwg.mxu0
    %696 = vmatprep.subr.mxu0 0.0
    %v697 = vand.u32 %v318, 4294901760
    %v698 = vsub.f32 %v318, %v697
    %v699 = vand.u32 %v698, 4294901760
    %700 = vmatpush1.msra.mxu0 %v699
    %701 = vmatprep.subr.mxu0 0.0
    %v702 = vand.u32 %v319, 4294901760
    %v703 = vsub.f32 %v319, %v702
    %v704 = vand.u32 %v703, 4294901760
    %705 = vmatpush1.msra.mxu0 %v704
    %706 = vmatprep.subr.mxu0 0.0
    %v707 = vand.u32 %v320, 4294901760
    %v708 = vsub.f32 %v320, %v707
    %v709 = vand.u32 %v708, 4294901760
    %710 = vmatpush1.msra.mxu0 %v709
    %711 = vmatprep.subr.mxu0 0.0
    %v712 = vand.u32 %v321, 4294901760
    %v713 = vsub.f32 %v321, %v712
    %v714 = vand.u32 %v713, 4294901760
    %715 = vmatpush1.msra.mxu0 %v714
    %716 = vmatprep.subr.mxu0 0.0
    %v717 = vand.u32 %v322, 4294901760
    %v718 = vsub.f32 %v322, %v717
    %v719 = vand.u32 %v718, 4294901760
    %720 = vmatpush1.msra.mxu0 %v719
    %721 = vmatprep.subr.mxu0 0.0
    %v722 = vand.u32 %v323, 4294901760
    %v723 = vsub.f32 %v323, %v722
    %v724 = vand.u32 %v723, 4294901760
    %725 = vmatpush1.msra.mxu0 %v724
    %726 = vmatprep.subr.mxu0 0.0
    %v727 = vand.u32 %v324, 4294901760
    %v728 = vsub.f32 %v324, %v727
    %v729 = vand.u32 %v728, 4294901760
    %730 = vmatpush1.msra.mxu0 %v729
    %731 = vmatprep.subr.mxu0 0.0
    %v732 = vand.u32 %v325, 4294901760
    %v733 = vsub.f32 %v325, %v732
    %v734 = vand.u32 %v733, 4294901760
    %735 = vmatpush1.msra.mxu0 %v734
    %736 = vmatprep.subr.mxu0 0.0
    %737 = vmatpush1.msra.mxu0 0.0
    %738 = vmatprep.subr.mxu0 0.0
    %739 = vmatpush1.msra.mxu0 0.0
    %740 = vmatprep.subr.mxu0 0.0
    %741 = vmatpush1.msra.mxu0 0.0
    %742 = vmatprep.subr.mxu0 0.0
    %743 = vmatpush1.msra.mxu0 0.0
    %744 = vmatprep.subr.mxu0 0.0
    %745 = vmatpush1.msra.mxu0 0.0
    %746 = vmatprep.subr.mxu0 0.0
    %747 = vmatpush1.msra.mxu0 0.0
    %748 = vmatprep.subr.mxu0 0.0
    %749 = vmatpush1.msra.mxu0 0.0
    %750 = vmatprep.subr.mxu0 0.0
    %751 = vmatpush1.msra.mxu0 0.0
    %752 = vmatprep.subr.mxu0 0.0
    %753 = vmatpush1.msra.mxu0 0.0
    %754 = vmatprep.subr.mxu0 0.0
    %755 = vmatpush1.msra.mxu0 0.0
    %756 = vmatprep.subr.mxu0 0.0
    %757 = vmatpush1.msra.mxu0 0.0
    %758 = vmatprep.subr.mxu0 0.0
    %759 = vmatpush1.msra.mxu0 0.0
    %760 = vmatprep.subr.mxu0 0.0
    %761 = vmatpush1.msra.mxu0 0.0
    %762 = vmatprep.subr.mxu0 0.0
    %763 = vmatpush1.msra.mxu0 0.0
    %764 = vmatprep.subr.mxu0 0.0
    %765 = vmatpush1.msra.mxu0 0.0
    %766 = vmatprep.subr.mxu0 0.0
    %767 = vmatpush1.msra.mxu0 0.0
    %768 = vmatprep.subr.mxu0 0.0
    %769 = vmatpush1.msra.mxu0 0.0
    %770 = vmatprep.subr.mxu0 0.0
    %771 = vmatpush1.msra.mxu0 0.0
    %772 = vmatprep.subr.mxu0 0.0
    %773 = vmatpush1.msra.mxu0 0.0
    %774 = vmatprep.subr.mxu0 0.0
    %775 = vmatpush1.msra.mxu0 0.0
    %776 = vmatprep.subr.mxu0 0.0
    %777 = vmatpush1.msra.mxu0 0.0
    %778 = vmatprep.subr.mxu0 0.0
    %779 = vmatpush1.msra.mxu0 0.0
    %780 = vmatprep.subr.mxu0 0.0
    %781 = vmatpush1.msra.mxu0 0.0
    %782 = vmatprep.subr.mxu0 0.0
    %783 = vmatpush1.msra.mxu0 0.0
    %784 = vmatprep.mubr.f32.mxu0 0.0
    %v785 = vand.u32 %v331, 4294901760
    %786 = vmatmul.mubr.f32.gmra.mrb[0].mxu0 %v785
    %v787 = vpop.f32.mrb[0].mxu0
    %v788 = vadd.f32 %v693, %v787
    %v789 = vpop.f32.mrb[0].mxu0
    %790 = vdwg.mxu0
    %791 = vmatprep.subr.mxu0 0.0
    %v792 = vand.u32 %v318, 4294901760
    %793 = vmatpush1.msra.mxu0 %v792
    %794 = vmatprep.subr.mxu0 0.0
    %v795 = vand.u32 %v319, 4294901760
    %796 = vmatpush1.msra.mxu0 %v795
    %797 = vmatprep.subr.mxu0 0.0
    %v798 = vand.u32 %v320, 4294901760
    %799 = vmatpush1.msra.mxu0 %v798
    %800 = vmatprep.subr.mxu0 0.0
    %v801 = vand.u32 %v321, 4294901760
    %802 = vmatpush1.msra.mxu0 %v801
    %803 = vmatprep.subr.mxu0 0.0
    %v804 = vand.u32 %v322, 4294901760
    %805 = vmatpush1.msra.mxu0 %v804
    %806 = vmatprep.subr.mxu0 0.0
    %v807 = vand.u32 %v323, 4294901760
    %808 = vmatpush1.msra.mxu0 %v807
    %809 = vmatprep.subr.mxu0 0.0
    %v810 = vand.u32 %v324, 4294901760
    %811 = vmatpush1.msra.mxu0 %v810
    %812 = vmatprep.subr.mxu0 0.0
    %v813 = vand.u32 %v325, 4294901760
    %814 = vmatpush1.msra.mxu0 %v813
    %815 = vmatprep.subr.mxu0 0.0
    %816 = vmatpush1.msra.mxu0 0.0
    %817 = vmatprep.subr.mxu0 0.0
    %818 = vmatpush1.msra.mxu0 0.0
    %819 = vmatprep.subr.mxu0 0.0
    %820 = vmatpush1.msra.mxu0 0.0
    %821 = vmatprep.subr.mxu0 0.0
    %822 = vmatpush1.msra.mxu0 0.0
    %823 = vmatprep.subr.mxu0 0.0
    %824 = vmatpush1.msra.mxu0 0.0
    %825 = vmatprep.subr.mxu0 0.0
    %826 = vmatpush1.msra.mxu0 0.0
    %827 = vmatprep.subr.mxu0 0.0
    %828 = vmatpush1.msra.mxu0 0.0
    %829 = vmatprep.subr.mxu0 0.0
    %830 = vmatpush1.msra.mxu0 0.0
    %831 = vmatprep.subr.mxu0 0.0
    %832 = vmatpush1.msra.mxu0 0.0
    %833 = vmatprep.subr.mxu0 0.0
    %834 = vmatpush1.msra.mxu0 0.0
    %835 = vmatprep.subr.mxu0 0.0
    %836 = vmatpush1.msra.mxu0 0.0
    %837 = vmatprep.subr.mxu0 0.0
    %838 = vmatpush1.msra.mxu0 0.0
    %839 = vmatprep.subr.mxu0 0.0
    %840 = vmatpush1.msra.mxu0 0.0
    %841 = vmatprep.subr.mxu0 0.0
    %842 = vmatpush1.msra.mxu0 0.0
    %843 = vmatprep.subr.mxu0 0.0
    %844 = vmatpush1.msra.mxu0 0.0
    %845 = vmatprep.subr.mxu0 0.0
    %846 = vmatpush1.msra.mxu0 0.0
    %847 = vmatprep.subr.mxu0 0.0
    %848 = vmatpush1.msra.mxu0 0.0
    %849 = vmatprep.subr.mxu0 0.0
    %850 = vmatpush1.msra.mxu0 0.0
    %851 = vmatprep.subr.mxu0 0.0
    %852 = vmatpush1.msra.mxu0 0.0
    %853 = vmatprep.subr.mxu0 0.0
    %854 = vmatpush1.msra.mxu0 0.0
    %855 = vmatprep.subr.mxu0 0.0
    %856 = vmatpush1.msra.mxu0 0.0
    %857 = vmatprep.subr.mxu0 0.0
    %858 = vmatpush1.msra.mxu0 0.0
    %859 = vmatprep.subr.mxu0 0.0
    %860 = vmatpush1.msra.mxu0 0.0
    %861 = vmatprep.subr.mxu0 0.0
    %862 = vmatpush1.msra.mxu0 0.0
    %863 = vmatprep.mubr.f32.mxu0 0.0
    %v864 = vand.u32 %v331, 4294901760
    %865 = vmatmul.mubr.f32.gmra.mrb[0].mxu0 %v864
    %v866 = vpop.f32.mrb[0].mxu0
    %v867 = vadd.f32 %v788, %v866
    %v868 = vpop.f32.mrb[0].mxu0
    %869 = vdwg.mxu0
    %870 = vst [vmem:[#allocation6] sm:$0x1] %v867
    // Predicated region
    $region18: #{tpu_custom_call.1} parent=1 // pred_check
      _
    $region19: #{tpu_custom_call.1} parent=1 // pred_check_branch
      %872 = sbr.rel (0) target = $region21
    $region20: #{tpu_custom_call.1} parent=1 // pred_region
      %s874 = ssub.s32 16, 16
      %875 = vsyncadd [#allocation5], %s874
      %s877 = sshll.u32 [#allocation6], 4
      %s878 = int_to_ptr.vmem [resolvable:$true] %s877
      %880 = dma.vmem_to_hbm [thread:$0]  %s878, 16, %s3, [#allocation5]
    $region21: #{tpu_custom_call.1} parent=1 // pred_fallthru
      _
    // Predicated region
    $region22: #{tpu_custom_call.1} parent=1 // pred_check
      _
    $region23: #{tpu_custom_call.1} parent=1 // pred_check_branch
      %882 = sbr.rel (0) target = $region25
    $region24: #{tpu_custom_call.1} parent=1 // pred_region
      %883 = dma.done [#allocation5], 16
    $region25: #{tpu_custom_call.1} parent=1 // pred_fallthru
      _
    %884 = vsyncpa [#allocation4], 1
    %885 = vsyncpa [#allocation5], 1

</llo_original>
